<compile_context>
chip_gen: v7x
topology: tpu7x:2x2x1
jax: 0.10.0
libtpu: 0.0.40
codegen_flags: <defaults>
</compile_context>

<pallas_src>
import functools

import jax
import jax.numpy as jnp
from jax.experimental import pallas as pl
from jax.experimental.pallas import tpu as pltpu

_LANES = 128
_SUBLANES = 8


def _mse_kernel(pred_ref, real_ref, out_ref, acc_ref, *, tile_rows, rows):
    c = pl.program_id(0)            # which TensorCore / which half of the rows
    k = pl.program_id(1)            # reduction step within this half
    steps = pl.num_programs(1)

    @pl.when(k == 0)
    def _():
        acc_ref[...] = jnp.zeros_like(acc_ref)

    blk = c * steps + k             # global row-block index (may be past the end)

    # Upcast in-kernel so HBM traffic stays at the native input dtype.
    p = pred_ref[...].astype(jnp.float32)
    r = real_ref[...].astype(jnp.float32)
    d = r - p

    is_full = (blk + 1) * tile_rows <= rows

    # Steady state: pure VPU sub/mul/add, no masking -> stays on the HBM roofline.
    @pl.when(is_full)
    def _():
        dd = d * d
        acc_ref[...] += dd.reshape(tile_rows // _SUBLANES, _SUBLANES, _LANES).sum(axis=0)

    # Only the last (possibly partial) block and the (possible) clamped
    # duplicate block of core 1 pay for the row mask.
    @pl.when(jnp.logical_not(is_full))
    def _():
        row = blk * tile_rows + jax.lax.broadcasted_iota(jnp.int32, d.shape, 0)
        dd = jnp.where(row < rows, d * d, 0.0)
        acc_ref[...] += dd.reshape(tile_rows // _SUBLANES, _SUBLANES, _LANES).sum(axis=0)

    @pl.when(k == steps - 1)
    def _():
        out_ref[...] = acc_ref[...]   # (8,128) partial sums for this core


def mse(pred, real, *, tile_rows=8192):
    assert pred.shape == real.shape, "pred/real must have identical shapes"
    n = pred.size
    assert n > 0

    flat_p = pred.reshape(-1)      # free reshape (contiguous), no dtype cast
    flat_r = real.reshape(-1)
    inv_n = 1.0 / float(n)

    rem = n % _LANES
    main = n - rem

    # <=127-element tail: trivial jnp expression instead of padding both inputs.
    if rem:
        td = flat_r[main:].astype(jnp.float32) - flat_p[main:].astype(jnp.float32)
        tail_sum = jnp.sum(td * td)
    else:
        tail_sum = jnp.float32(0.0)

    if main == 0:
        return tail_sum * inv_n

    rows = main // _LANES
    # TODO(synk): for ragged sizes the prefix slice below may still copy the
    # "main" region once; a fully copy-free ragged path would need a manual-DMA
    # kernel over the 1-D HBM buffer.
    p_main = flat_p if rem == 0 else flat_p[:main]
    r_main = flat_r if rem == 0 else flat_r[:main]
    p2d = p_main.reshape(rows, _LANES)
    r2d = r_main.reshape(rows, _LANES)

    # Block rows: multiple of 8 (sublane-aligned), clamped to the array.
    tr = min(int(tile_rows), pl.cdiv(rows, _SUBLANES) * _SUBLANES)
    tr = max(_SUBLANES, (tr // _SUBLANES) * _SUBLANES)
    assert tr % _SUBLANES == 0

    blocks_total = pl.cdiv(rows, tr)
    steps = (blocks_total + 1) // 2          # row-blocks per core (2-way split)
    grid = (2, steps)

    def in_map(c, k):
        # Clamp so core 1's possible extra step re-reads a valid block; the
        # kernel masks its contribution to zero (blk >= blocks_total there).
        return (jnp.minimum(c * steps + k, blocks_total - 1), 0)

    kernel = functools.partial(_mse_kernel, tile_rows=tr, rows=rows)

    # Double-buffered input footprint + slack; explicit so big tiles are safe
    # even on v5e's 16 MiB scoped-VMEM default, and modest enough for v7x.
    in_bytes = 2 * tr * _LANES * (p2d.dtype.itemsize + r2d.dtype.itemsize)
    vmem_limit = int(min(max(in_bytes + (4 << 20), 16 << 20), 48 << 20))

    partials = pl.pallas_call(
        kernel,
        out_shape=jax.ShapeDtypeStruct((2 * _SUBLANES, _LANES), jnp.float32),
        grid_spec=pltpu.PrefetchScalarGridSpec(
            num_scalar_prefetch=0,
            grid=grid,
            in_specs=[
                pl.BlockSpec((tr, _LANES), in_map),
                pl.BlockSpec((tr, _LANES), in_map),
            ],
            out_specs=pl.BlockSpec((_SUBLANES, _LANES), lambda c, k: (c, 0)),
            scratch_shapes=[pltpu.VMEM((_SUBLANES, _LANES), jnp.float32)],
        ),
        compiler_params=pltpu.CompilerParams(
            dimension_semantics=("parallel", "arbitrary"),
            vmem_limit_bytes=vmem_limit,
        ),
    )(p2d, r2d)

    return (jnp.sum(partials) + tail_sum) * inv_n


if __name__ == "__main__":
    key = jax.random.PRNGKey(0)
    k1, k2 = jax.random.split(key)

    # Small NCHW-style inputs: batch=2, channels=4, spatial=16x16
    pred = jax.random.normal(k1, (2, 4, 16, 16), dtype=jnp.float32)
    real = jax.random.normal(k2, (2, 4, 16, 16), dtype=jnp.float32)
    result = mse(pred, real)
    jax.block_until_ready(result)
    ref = jnp.mean((real - pred) ** 2)
    assert jnp.allclose(result, ref, rtol=1e-5, atol=1e-6), (result, ref)

    # Ragged shape: exercises the lane tail, a partial row-block, the clamped
    # duplicate block, and both halves of the parallel axis.
    p2 = jax.random.normal(k1, (3, 5, 17, 13), dtype=jnp.float32)
    r2 = jax.random.normal(k2, (3, 5, 17, 13), dtype=jnp.float32)
    res2 = mse(p2, r2, tile_rows=8)
    jax.block_until_ready(res2)
    ref2 = jnp.mean((r2 - p2) ** 2)
    assert jnp.allclose(res2, ref2, rtol=1e-5, atol=1e-6), (res2, ref2)

    # Larger multi-block case: several row-blocks per core + a partial block.
    p3 = jax.random.normal(k1, (20, 4, 128, 128), dtype=jnp.float32)
    r3 = jax.random.normal(k2, (20, 4, 128, 128), dtype=jnp.float32)
    res3 = mse(p3, r3, tile_rows=4096)
    jax.block_until_ready(res3)
    ref3 = jnp.mean((r3 - p3) ** 2)
    assert jnp.allclose(res3, ref3, rtol=1e-5, atol=1e-6), (res3, ref3)

    print("KERNEL_OK")
</pallas_src>

<mosaic_0001>
module attributes {stable_mosaic.version = 11 : i64} {
  func.func @_mse_kernel(%arg0: i32, %arg1: i32, %arg2: memref<16x128xf32, #tpu.memory_space<vmem>>, %arg3: memref<16x128xf32, #tpu.memory_space<vmem>>, %arg4: memref<8x128xf32, #tpu.memory_space<vmem>>, %arg5: memref<8x128xf32, #tpu.memory_space<vmem>>) attributes {dimension_semantics = [#tpu.dimension_semantics<parallel>, #tpu.dimension_semantics<arbitrary>], iteration_bounds = array<i64: 2, 1>, scalar_prefetch = 0 : i64, scratch_operands = 1 : i64, tpu.core_type = #tpu.core_type<tc>, window_params = [{transform_indices = @transform_0, window_bounds = array<i64: 16, 128>}, {transform_indices = @transform_1, window_bounds = array<i64: 16, 128>}, {transform_indices = @transform_2, window_bounds = array<i64: 8, 128>}]} {
    %c0_i32 = arith.constant 0 : i32
    %0 = arith.cmpi eq, %arg1, %c0_i32 : i32
    %1 = arith.extui %0 : i1 to i32
    %c0_i32_0 = arith.constant 0 : i32
    %2 = arith.cmpi ne, %1, %c0_i32_0 : i32
    scf.if %2 {
      %cst = arith.constant 0.000000e+00 : f32
      %19 = vector.broadcast %cst : f32 to vector<8x128xf32>
      %c0_10 = arith.constant 0 : index
      %c0_11 = arith.constant 0 : index
      %20 = vector.load %arg5[%c0_10, %c0_11] : memref<8x128xf32, #tpu.memory_space<vmem>>, vector<8x128xf32>
      tpu.vector_store %arg5[%c0_10, %c0_11], %19 {strides = array<i32>} : memref<8x128xf32, #tpu.memory_space<vmem>>, vector<8x128xf32>,
    } else {
    }
    %c1_i32 = arith.constant 1 : i32
    %3 = arith.muli %arg0, %c1_i32 : i32
    %4 = arith.addi %3, %arg1 : i32
    %c0 = arith.constant 0 : index
    %c0_1 = arith.constant 0 : index
    %5 = vector.load %arg2[%c0, %c0_1] : memref<16x128xf32, #tpu.memory_space<vmem>>, vector<16x128xf32>
    %c0_2 = arith.constant 0 : index
    %c0_3 = arith.constant 0 : index
    %6 = vector.load %arg3[%c0_2, %c0_3] : memref<16x128xf32, #tpu.memory_space<vmem>>, vector<16x128xf32>
    %7 = arith.subf %6, %5 : vector<16x128xf32>
    %c1_i32_4 = arith.constant 1 : i32
    %8 = arith.addi %4, %c1_i32_4 : i32
    %c16_i32 = arith.constant 16 : i32
    %9 = arith.muli %8, %c16_i32 : i32
    %c16_i32_5 = arith.constant 16 : i32
    %10 = arith.cmpi sle, %9, %c16_i32_5 : i32
    %11 = arith.extui %10 : i1 to i32
    %c0_i32_6 = arith.constant 0 : i32
    %12 = arith.cmpi ne, %11, %c0_i32_6 : i32
    scf.if %12 {
      %19 = arith.mulf %7, %7 : vector<16x128xf32>
      %c0_10 = arith.constant 0 : index
      %c0_11 = arith.constant 0 : index
      %20 = vector.load %arg5[%c0_10, %c0_11] : memref<8x128xf32, #tpu.memory_space<vmem>>, vector<8x128xf32>
      %21 = vector.shape_cast %19 : vector<16x128xf32> to vector<2x8x128xf32>
      %cst = arith.constant dense<0.000000e+00> : vector<8x128xf32>
      %22 = vector.multi_reduction <add>, %21, %cst [0] : vector<2x8x128xf32> to vector<8x128xf32>
      %23 = arith.addf %20, %22 : vector<8x128xf32>
      %c0_12 = arith.constant 0 : index
      %c0_13 = arith.constant 0 : index
      %24 = vector.load %arg5[%c0_12, %c0_13] : memref<8x128xf32, #tpu.memory_space<vmem>>, vector<8x128xf32>
      tpu.vector_store %arg5[%c0_12, %c0_13], %23 {strides = array<i32>} : memref<8x128xf32, #tpu.memory_space<vmem>>, vector<8x128xf32>,
    } else {
    }
    %true = arith.constant true
    %13 = arith.xori %10, %true : i1
    %14 = arith.extui %13 : i1 to i32
    %c0_i32_7 = arith.constant 0 : i32
    %15 = arith.cmpi ne, %14, %c0_i32_7 : i32
    scf.if %15 {
      %c16_i32_10 = arith.constant 16 : i32
      %19 = arith.muli %4, %c16_i32_10 : i32
      %20 = tpu.iota {dimensions = array<i32: 0>} : vector<16x128xi32>
      %21 = vector.broadcast %19 : i32 to vector<16x128xi32>
      %22 = arith.addi %21, %20 : vector<16x128xi32>
      %c16_i32_11 = arith.constant 16 : i32
      %23 = vector.broadcast %c16_i32_11 : i32 to vector<16x128xi32>
      %24 = arith.cmpi slt, %22, %23 : vector<16x128xi32>
      %25 = arith.mulf %7, %7 : vector<16x128xf32>
      %cst = arith.constant 0.000000e+00 : f32
      %26 = vector.broadcast %cst : f32 to vector<16x128xf32>
      %27 = arith.select %24, %25, %26 : vector<16x128xi1>, vector<16x128xf32>
      %c0_12 = arith.constant 0 : index
      %c0_13 = arith.constant 0 : index
      %28 = vector.load %arg5[%c0_12, %c0_13] : memref<8x128xf32, #tpu.memory_space<vmem>>, vector<8x128xf32>
      %29 = vector.shape_cast %27 : vector<16x128xf32> to vector<2x8x128xf32>
      %cst_14 = arith.constant dense<0.000000e+00> : vector<8x128xf32>
      %30 = vector.multi_reduction <add>, %29, %cst_14 [0] : vector<2x8x128xf32> to vector<8x128xf32>
      %31 = arith.addf %28, %30 : vector<8x128xf32>
      %c0_15 = arith.constant 0 : index
      %c0_16 = arith.constant 0 : index
      %32 = vector.load %arg5[%c0_15, %c0_16] : memref<8x128xf32, #tpu.memory_space<vmem>>, vector<8x128xf32>
      tpu.vector_store %arg5[%c0_15, %c0_16], %31 {strides = array<i32>} : memref<8x128xf32, #tpu.memory_space<vmem>>, vector<8x128xf32>,
    } else {
    }
    %c0_i32_8 = arith.constant 0 : i32
    %16 = arith.cmpi eq, %arg1, %c0_i32_8 : i32
    %17 = arith.extui %16 : i1 to i32
    %c0_i32_9 = arith.constant 0 : i32
    %18 = arith.cmpi ne, %17, %c0_i32_9 : i32
    scf.if %18 {
      %c0_10 = arith.constant 0 : index
      %c0_11 = arith.constant 0 : index
      %19 = vector.load %arg5[%c0_10, %c0_11] : memref<8x128xf32, #tpu.memory_space<vmem>>, vector<8x128xf32>
      %c0_12 = arith.constant 0 : index
      %c0_13 = arith.constant 0 : index
      %20 = vector.load %arg4[%c0_12, %c0_13] : memref<8x128xf32, #tpu.memory_space<vmem>>, vector<8x128xf32>
      tpu.vector_store %arg4[%c0_12, %c0_13], %19 {strides = array<i32>} : memref<8x128xf32, #tpu.memory_space<vmem>>, vector<8x128xf32>,
    } else {
    }
    return
  }
  func.func @transform_0(%arg0: i32, %arg1: i32) -> (i32, i32) {
    %c1_i32 = arith.constant 1 : i32
    %0 = arith.muli %arg0, %c1_i32 : i32
    %1 = arith.addi %0, %arg1 : i32
    %c0_i32 = arith.constant 0 : i32
    %2 = arith.minsi %1, %c0_i32 : i32
    %c0_i32_0 = arith.constant 0 : i32
    %c0_i32_1 = arith.constant 0 : i32
    return %2, %c0_i32_0 : i32, i32
  }
  func.func @transform_1(%arg0: i32, %arg1: i32) -> (i32, i32) {
    %c1_i32 = arith.constant 1 : i32
    %0 = arith.muli %arg0, %c1_i32 : i32
    %1 = arith.addi %0, %arg1 : i32
    %c0_i32 = arith.constant 0 : i32
    %2 = arith.minsi %1, %c0_i32 : i32
    %c0_i32_0 = arith.constant 0 : i32
    %c0_i32_1 = arith.constant 0 : i32
    return %2, %c0_i32_0 : i32, i32
  }
  func.func @transform_2(%arg0: i32, %arg1: i32) -> (i32, i32) {
    %c0_i32 = arith.constant 0 : i32
    %c0_i32_0 = arith.constant 0 : i32
    return %arg0, %c0_i32 : i32, i32
  }
}

</mosaic_0001>

<llo_original>
// kernel: tpu_custom_call.1
$region0: #{tpu_custom_call.1}
  #allocation0 [shape = 'u32[]', space=smem, size = 0x4, offset = 0x4, fixed_abs, tag = 'smem constant byte address 0x4 - core index']
  #allocation1 [shape = 'u32[144,128]{1,0:T(1,128)}', space=vmem, size = 0x12000, scoped, tag = 'internal scratch']
  #allocation2 [shape = 'f32[8,128]{1,0:T(8,128)}', space=vmem, size = 0x1000, scoped, tag = 'scratch operand']
  %s0 = inlined_call_operand.hbm [shape: f32[16,128], index: 0, kind: input, shape index: {}]
  %s1 = inlined_call_operand.hbm [shape: f32[16,128], index: 1, kind: input, shape index: {}]
  %s2 = inlined_call_operand.hbm [shape: f32[16,128], index: 2, kind: output, shape index: {}]
  %s3 = sld [smem:[#allocation0]]
  $region65: #{tpu_custom_call.1} parent=0
    _
  %s5 = ssub.s32 1, %s3
  %s6 = scalar_select 0, %s5, %s3
  $region1: #{tpu_custom_call.1} parent=0
    #allocation3 [shape = 'u8[16384]{0}', space=vmem, size = 0x4000, scoped, tag = 'input window, operand 0']
    #allocation4 [shape = 's32[2]{0}', space=sflag, size = 0x8, scoped, tag = 'scoped memory for tpu_custom_call.1']
    #allocation5 [shape = 's32[2]{0}', space=sflag, size = 0x8, scoped, tag = 'scoped memory for tpu_custom_call.1']
    #allocation6 [shape = 'u8[16384]{0}', space=vmem, size = 0x4000, scoped, tag = 'input window, operand 1']
    #allocation7 [shape = 's32[2]{0}', space=sflag, size = 0x8, scoped, tag = 'scoped memory for tpu_custom_call.1']
    #allocation8 [shape = 'u8[8192]{0}', space=vmem, size = 0x2000, scoped, tag = 'output window, operand 0']
    %7 = vsyncpa [#allocation4], 0
    %s8 = scalar_lea.sflag [#allocation4], 1
    %9 = vsyncpa %s8, 0
    %10 = vsyncpa [#allocation7], 0
    %s11 = scalar_lea.sflag [#allocation7], 1
    %12 = vsyncpa %s11, 0
    %13 = vsyncpa [#allocation5], 0
    %s14 = scalar_lea.sflag [#allocation5], 1
    %15 = vsyncpa %s14, 0
    loop: start=0, step=1, limit=4
    $region2: #{tpu_custom_call.1} parent=1 // loop_pre_header
      _
    $region3: #{tpu_custom_call.1} parent=1 // loop_header
      %s17 = sphi 0, %s21
      %p18 = scmp.ge.s32.totalorder %s17, 4
      %s24 = sphi 0, %s36
      %s25 = sphi 0, %s32
      %s26 = sphi 0, %s24
      %s27 = sphi 0, %s25
      %s28 = sphi 0, %s26
      %s29 = sphi 0, %s27
      %s45 = sphi 0, %s47
      %s48 = sphi 0, %s45
      %s49 = sphi 0, %s48
      %s65 = sphi 0, %s49
      %s77 = sphi 0, %s79
      %s80 = sphi 0, %s77
      %s81 = sphi 0, %s80
      %s97 = sphi 0, %s81
      %s103 = sphi 0, %s105
      %s106 = sphi 0, %s103
      %s107 = sphi 0, %s106
      %s123 = sphi 0, %s107
    $region4: #{tpu_custom_call.1} parent=1 // loop_header_branch
      %20 = sbr.rel (%p18) target = $region8
    $region5: #{tpu_custom_call.1} parent=1 // loop_body
      %s22 = ssub.s32 %s17, 1
      %s23 = ssub.s32 %s17, 2
      %s30 = sadd.s32 1, %s25
      %p31 = scmp.ge.s32.totalorder %s30, 1
      %s32 = scalar_select %p31, 0, %s30
      %s33 = sadd.s32 1, %s24
      %s34 = scalar_select %p31, %s33, %s24
      %p35 = scmp.ge.s32.totalorder %s34, 2
      %s36 = scalar_select %p35, 0, %s34
      %s37 = sadd.s32 %s24, %s25
      %p38 = scmp.lt.s32.totalorder %s37, 0
      %s39 = scalar_select %p38, %s37, 0
      %s40 = sadd.s32 %s36, %s32
      %p41 = scmp.lt.s32.totalorder %s40, 0
      %s42 = scalar_select %p41, %s40, 0
      %s43 = ssub.s32 %s39, %s42
      %p44 = scmp.eq.s32.totalorder %s43, 0
      %s46 = sadd.s32 %s45, 1
      %s47 = scalar_select %p44, %s45, %s46
      %p50 = pneg %p44
      %p51 = scmp.eq.s32.totalorder %s17, 1
      %p52 = por %p50, %p51
      %p53 = scmp.ne.s32.totalorder %s45, %s48
      %p54 = scmp.eq.s32.totalorder %s17, 0
      %p55 = por %p53, %p54
      %p56 = scmp.ne.s32.totalorder %s45, %s48
      %p57 = scmp.eq.s32.totalorder %s22, 1
      %p58 = por %p56, %p57
      %p59 = scmp.ne.s32.totalorder %s48, %s49
      %p60 = scmp.eq.s32.totalorder %s22, 0
      %p61 = por %p59, %p60
      %p62 = scmp.ne.s32.totalorder %s48, %s49
      %p63 = scmp.eq.s32.totalorder %s23, 1
      %p64 = por %p62, %p63
      %p66 = scmp.ne.s32.totalorder %s49, %s65
      %p67 = scmp.eq.s32.totalorder %s23, 0
      %p68 = por %p66, %p67
      %s69 = sadd.s32 %s24, %s25
      %p70 = scmp.lt.s32.totalorder %s69, 0
      %s71 = scalar_select %p70, %s69, 0
      %s72 = sadd.s32 %s36, %s32
      %p73 = scmp.lt.s32.totalorder %s72, 0
      %s74 = scalar_select %p73, %s72, 0
      %s75 = ssub.s32 %s71, %s74
      %p76 = scmp.eq.s32.totalorder %s75, 0
      %s78 = sadd.s32 %s77, 1
      %s79 = scalar_select %p76, %s77, %s78
      %p82 = pneg %p76
      %p83 = scmp.eq.s32.totalorder %s17, 1
      %p84 = por %p82, %p83
      %p85 = scmp.ne.s32.totalorder %s77, %s80
      %p86 = scmp.eq.s32.totalorder %s17, 0
      %p87 = por %p85, %p86
      %p88 = scmp.ne.s32.totalorder %s77, %s80
      %p89 = scmp.eq.s32.totalorder %s22, 1
      %p90 = por %p88, %p89
      %p91 = scmp.ne.s32.totalorder %s80, %s81
      %p92 = scmp.eq.s32.totalorder %s22, 0
      %p93 = por %p91, %p92
      %p94 = scmp.ne.s32.totalorder %s80, %s81
      %p95 = scmp.eq.s32.totalorder %s23, 1
      %p96 = por %p94, %p95
      %p98 = scmp.ne.s32.totalorder %s81, %s97
      %p99 = scmp.eq.s32.totalorder %s23, 0
      %p100 = por %p98, %p99
      %s101 = ssub.s32 %s24, %s36
      %p102 = scmp.eq.s32.totalorder %s101, 0
      %s104 = sadd.s32 %s103, 1
      %s105 = scalar_select %p102, %s103, %s104
      %p108 = pneg %p102
      %p109 = scmp.eq.s32.totalorder %s17, 1
      %p110 = por %p108, %p109
      %p111 = scmp.ne.s32.totalorder %s103, %s106
      %p112 = scmp.eq.s32.totalorder %s17, 0
      %p113 = por %p111, %p112
      %p114 = scmp.ne.s32.totalorder %s103, %s106
      %p115 = scmp.eq.s32.totalorder %s22, 1
      %p116 = por %p114, %p115
      %p117 = scmp.ne.s32.totalorder %s106, %s107
      %p118 = scmp.eq.s32.totalorder %s22, 0
      %p119 = por %p117, %p118
      %p120 = scmp.ne.s32.totalorder %s106, %s107
      %p121 = scmp.eq.s32.totalorder %s23, 1
      %p122 = por %p120, %p121
      %p124 = scmp.ne.s32.totalorder %s107, %s123
      %p125 = scmp.eq.s32.totalorder %s23, 0
      %p126 = por %p124, %p125
      %p127 = scmp.le.s32.totalorder 1, %s17
      %p128 = scmp.lt.s32.totalorder %s17, 3
      %p129 = pnand %p127, %p128
      %p130 = pneg %p129
      // Predicated region
      $region9: #{tpu_custom_call.1} parent=5 // pred_check
        _
      $region10: #{tpu_custom_call.1} parent=5 // pred_check_branch
        %132 = sbr.rel (%p129) target = $region12
      $region11: #{tpu_custom_call.1} parent=5 // pred_region
        %s133 = ssub.s32 %s17, 1
      $region12: #{tpu_custom_call.1} parent=5 // pred_fallthru
        _
      %p134 = scmp.lt.s32.totalorder %s17, 2
      // Predicated region
      $region13: #{tpu_custom_call.1} parent=5 // pred_check
        %p135 = pneg %p134
      $region14: #{tpu_custom_call.1} parent=5 // pred_check_branch
        %137 = sbr.rel (%p135) target = $region16
      $region15: #{tpu_custom_call.1} parent=5 // pred_region
        // Predicated region
        $region17: #{tpu_custom_call.1} parent=15 // pred_check
          %p138 = pneg %p55
        $region18: #{tpu_custom_call.1} parent=15 // pred_check_branch
          %140 = sbr.rel (%p138) target = $region20
        $region19: #{tpu_custom_call.1} parent=15 // pred_region
          %s141 = sand.u32 %s45, 1
          %s142 = scalar_lea.sflag [#allocation4], %s141
          %s143 = sand.u32 %s45, 1
          %s144 = smul.addr %s143, 16
          %s145 = scalar_lea.vmem [#allocation3], %s144
          %s146 = sadd.s32 %s24, %s25
          %p147 = scmp.lt.s32.totalorder %s146, 0
          %s148 = scalar_select %p147, %s146, 0
          %s149 = smul.u32 2, %s148
          %s151 = ssub.s32 256, 256
          %152 = vsyncadd %s142, %s151
          %s153 = smul.addr %s149, 128
          %s154 = scalar_lea.hbm %s0, %s153
          %s155 = sshll.u32 %s145, 4
          %s156 = int_to_ptr.vmem [resolvable:$true] %s155
          %161 = dma.hbm_to_vmem [thread:$0]  %s154, 256, %s156, %s142, 128, 128, 8
        $region20: #{tpu_custom_call.1} parent=15 // pred_fallthru
          _
        // Predicated region
        $region21: #{tpu_custom_call.1} parent=15 // pred_check
          %p162 = pneg %p87
        $region22: #{tpu_custom_call.1} parent=15 // pred_check_branch
          %164 = sbr.rel (%p162) target = $region24
        $region23: #{tpu_custom_call.1} parent=15 // pred_region
          %s165 = sand.u32 %s77, 1
          %s166 = scalar_lea.sflag [#allocation7], %s165
          %s167 = sand.u32 %s77, 1
          %s168 = smul.addr %s167, 16
          %s169 = scalar_lea.vmem [#allocation6], %s168
          %s170 = sadd.s32 %s24, %s25
          %p171 = scmp.lt.s32.totalorder %s170, 0
          %s172 = scalar_select %p171, %s170, 0
          %s173 = smul.u32 2, %s172
          %s175 = ssub.s32 256, 256
          %176 = vsyncadd %s166, %s175
          %s177 = smul.addr %s173, 128
          %s178 = scalar_lea.hbm %s1, %s177
          %s179 = sshll.u32 %s169, 4
          %s180 = int_to_ptr.vmem [resolvable:$true] %s179
          %185 = dma.hbm_to_vmem [thread:$0]  %s178, 256, %s180, %s166, 128, 128, 8
        $region24: #{tpu_custom_call.1} parent=15 // pred_fallthru
          _
      $region16: #{tpu_custom_call.1} parent=5 // pred_fallthru
        _
      %p186 = scmp.le.s32.totalorder 1, %s17
      %p187 = scmp.lt.s32.totalorder %s17, 3
      %p188 = pnand %p186, %p187
      %p189 = pneg %p188
      // Predicated region
      $region25: #{tpu_custom_call.1} parent=5 // pred_check
        _
      $region26: #{tpu_custom_call.1} parent=5 // pred_check_branch
        %191 = sbr.rel (%p188) target = $region28
      $region27: #{tpu_custom_call.1} parent=5 // pred_region
        %s192 = ssub.s32 %s17, 1
        %s193 = sand.u32 %s48, 1
        %s194 = scalar_lea.sflag [#allocation4], %s193
        %s195 = sand.u32 %s48, 1
        %s196 = smul.addr %s195, 16
        %s197 = scalar_lea.vmem [#allocation3], %s196
        // Predicated region
        $region29: #{tpu_custom_call.1} parent=27 // pred_check
          %p198 = pneg %p61
        $region30: #{tpu_custom_call.1} parent=27 // pred_check_branch
          %200 = sbr.rel (%p198) target = $region32
        $region31: #{tpu_custom_call.1} parent=27 // pred_region
          %201 = dma.done %s194, 256
        $region32: #{tpu_custom_call.1} parent=27 // pred_fallthru
          _
        %s202 = sand.u32 %s80, 1
        %s203 = scalar_lea.sflag [#allocation7], %s202
        %s204 = sand.u32 %s80, 1
        %s205 = smul.addr %s204, 16
        %s206 = scalar_lea.vmem [#allocation6], %s205
        // Predicated region
        $region33: #{tpu_custom_call.1} parent=27 // pred_check
          %p207 = pneg %p93
        $region34: #{tpu_custom_call.1} parent=27 // pred_check_branch
          %209 = sbr.rel (%p207) target = $region36
        $region35: #{tpu_custom_call.1} parent=27 // pred_region
          %210 = dma.done %s203, 256
        $region36: #{tpu_custom_call.1} parent=27 // pred_fallthru
          _
        %s211 = sand.u32 %s48, 1
        %s212 = scalar_lea.sflag [#allocation4], %s211
        %s213 = sand.u32 %s48, 1
        %s214 = smul.addr %s213, 16
        %s215 = scalar_lea.vmem [#allocation3], %s214
        %p216 = pneg %p61
        %p217 = pneg %p58
        %s218 = sand.u32 %s80, 1
        %s219 = scalar_lea.sflag [#allocation7], %s218
        %s220 = sand.u32 %s80, 1
        %s221 = smul.addr %s220, 16
        %s222 = scalar_lea.vmem [#allocation6], %s221
        %p223 = pneg %p93
        %p224 = pneg %p90
        %p225 = pneg %p119
        %p226 = pneg %p116
        %s227 = sand.u32 %s106, 1
        %s228 = scalar_lea.sflag [#allocation5], %s227
        %s229 = sand.u32 %s106, 1
        %s230 = smul.addr %s229, 8
        %s231 = scalar_lea.vmem [#allocation8], %s230
        %s232 = sadd.s32 %s26, %s27
        %p233 = scmp.lt.s32.totalorder %s232, 0
        %s234 = scalar_select %p233, %s232, 0
        %s235 = smul.u32 2, %s234
        %s236 = sadd.s32 %s26, %s27
        %p237 = scmp.lt.s32.totalorder %s236, 0
        %s238 = scalar_select %p237, %s236, 0
        %s239 = smul.u32 2, %s238
        %p240 = scmp.eq.s32.totalorder %s27, 0
        // Predicated region
        $region37: #{tpu_custom_call.1} parent=27 // pred_check
          %p241 = pneg %p240
        $region38: #{tpu_custom_call.1} parent=27 // pred_check_branch
          %243 = sbr.rel (%p241) target = $region40
        $region39: #{tpu_custom_call.1} parent=27 // pred_region
          %244 = vst [vmem:[#allocation2] sm:$0xff] 0.0
        $region40: #{tpu_custom_call.1} parent=27 // pred_fallthru
          _
        %s245 = sadd.s32 %s26, %s27
        %v246 = vld [vmem:[%s197] sm:$0xff]
        %v247 = vld [vmem:[%s197 + $0x8] sm:$0xff]
        %v248 = vld [vmem:[%s206] sm:$0xff]
        %v249 = vld [vmem:[%s206 + $0x8] sm:$0xff]
        %v250 = vsub.f32 %v248, %v246
        %v251 = vsub.f32 %v249, %v247
        %s252 = sadd.s32 %s245, 1
        %s253 = smul.u32 %s252, 16
        %p254 = scmp.le.s32.totalorder %s253, 16
        // Predicated region
        $region41: #{tpu_custom_call.1} parent=27 // pred_check
          %p255 = pneg %p254
        $region42: #{tpu_custom_call.1} parent=27 // pred_check_branch
          %257 = sbr.rel (%p255) target = $region44
        $region43: #{tpu_custom_call.1} parent=27 // pred_region
          %v258 = vmul.f32 %v250, %v250
          %v259 = vmul.f32 %v251, %v251
          %v260 = vld [vmem:[#allocation2] sm:$0xff]
          %v261 = vadd.f32 %v258, %v259
          %v262 = vadd.f32 %v260, %v261
          %263 = vst [vmem:[#allocation2] sm:$0xff] %v262
        $region44: #{tpu_custom_call.1} parent=27 // pred_fallthru
          _
        %p264 = scmp.gt.s32.totalorder %s253, 16
        // Predicated region
        $region45: #{tpu_custom_call.1} parent=27 // pred_check
          %p265 = pneg %p264
        $region46: #{tpu_custom_call.1} parent=27 // pred_check_branch
          %267 = sbr.rel (%p265) target = $region48
        $region47: #{tpu_custom_call.1} parent=27 // pred_region
          %s268 = smul.u32 %s245, 16
          %v269 = vlaneseq
          %v270 = vshrl.u32 %v269, 7
          %v271 = vadd.s32 %v270, 8
          %v272 = vstv %s268
          %v273 = vadd.s32 %v272, %v270
          %v274 = vadd.s32 %v272, %v271
          %vm275 = vcmp.lt.s32.totalorder %v273, 16
          %vm276 = vcmp.lt.s32.totalorder %v274, 16
          %v277 = vmul.f32 %v250, %v250
          %v278 = vmul.f32 %v251, %v251
          %v279 = vsel %vm275, %v277, 0.0
          %v280 = vsel %vm276, %v278, 0.0
          %v281 = vld [vmem:[#allocation2] sm:$0xff]
          %v282 = vadd.f32 %v279, %v280
          %v283 = vadd.f32 %v281, %v282
          %284 = vst [vmem:[#allocation2] sm:$0xff] %v283
        $region48: #{tpu_custom_call.1} parent=27 // pred_fallthru
          _
        // Predicated region
        $region49: #{tpu_custom_call.1} parent=27 // pred_check
          %p285 = pneg %p240
        $region50: #{tpu_custom_call.1} parent=27 // pred_check_branch
          %287 = sbr.rel (%p285) target = $region52
        $region51: #{tpu_custom_call.1} parent=27 // pred_region
          %v288 = vld [vmem:[#allocation2] sm:$0xff]
          %289 = vst [vmem:[%s231] sm:$0xff] %v288
        $region52: #{tpu_custom_call.1} parent=27 // pred_fallthru
          _
        %s290 = sand.u32 %s106, 1
        %s291 = scalar_lea.sflag [#allocation5], %s290
        %s292 = sand.u32 %s106, 1
        %s293 = smul.addr %s292, 8
        %s294 = scalar_lea.vmem [#allocation8], %s293
        // Predicated region
        $region53: #{tpu_custom_call.1} parent=27 // pred_check
          %p295 = pneg %p116
        $region54: #{tpu_custom_call.1} parent=27 // pred_check_branch
          %297 = sbr.rel (%p295) target = $region56
        $region55: #{tpu_custom_call.1} parent=27 // pred_region
          %s299 = ssub.s32 128, 128
          %300 = vsyncadd %s291, %s299
          %s301 = smul.addr %s26, 128
          %s302 = scalar_lea.hbm %s2, %s301
          %s304 = sshll.u32 %s294, 4
          %s305 = int_to_ptr.vmem [resolvable:$true] %s304
          %307 = dma.vmem_to_hbm [thread:$0]  %s305, 128, %s302, %s291
        $region56: #{tpu_custom_call.1} parent=27 // pred_fallthru
          _
      $region28: #{tpu_custom_call.1} parent=5 // pred_fallthru
        _
      %p308 = scmp.le.s32.totalorder 2, %s17
      // Predicated region
      $region57: #{tpu_custom_call.1} parent=5 // pred_check
        %p309 = pneg %p308
      $region58: #{tpu_custom_call.1} parent=5 // pred_check_branch
        %311 = sbr.rel (%p309) target = $region60
      $region59: #{tpu_custom_call.1} parent=5 // pred_region
        %s312 = ssub.s32 %s17, 2
        // Predicated region
        $region61: #{tpu_custom_call.1} parent=59 // pred_check
          %p313 = pneg %p122
        $region62: #{tpu_custom_call.1} parent=59 // pred_check_branch
          %315 = sbr.rel (%p313) target = $region64
        $region63: #{tpu_custom_call.1} parent=59 // pred_region
          %s316 = sand.u32 %s107, 1
          %s317 = scalar_lea.sflag [#allocation5], %s316
          %s318 = sand.u32 %s107, 1
          %s319 = smul.addr %s318, 8
          %s320 = scalar_lea.vmem [#allocation8], %s319
          %321 = dma.done %s317, 128
        $region64: #{tpu_custom_call.1} parent=59 // pred_fallthru
          _
      $region60: #{tpu_custom_call.1} parent=5 // pred_fallthru
        _
    $region6: #{tpu_custom_call.1} parent=1 // loop_footer
      %s21 = sadd.s32 1, %s17
    $region7: #{tpu_custom_call.1} parent=1 // loop_footer_branch
      %16 = sbr.rel target = $region3
    $region8: #{tpu_custom_call.1} parent=1 // loop_exit
      _
    %322 = vsyncpa [#allocation4], 1
    %s323 = scalar_lea.sflag [#allocation4], 1
    %324 = vsyncpa %s323, 1
    %325 = vsyncpa [#allocation7], 1
    %s326 = scalar_lea.sflag [#allocation7], 1
    %327 = vsyncpa %s326, 1
    %328 = vsyncpa [#allocation5], 1
    %s329 = scalar_lea.sflag [#allocation5], 1
    %330 = vsyncpa %s329, 1

</llo_original>
